<compile_context>
chip_gen: v6e
topology: v6e:2x2x1
jax: 0.10.0
libtpu: 0.0.40
codegen_flags: <defaults>
</compile_context>

<pallas_src>
import math

import jax
import jax.numpy as jnp
from jax.experimental import pallas as pl
from jax.experimental.pallas import tpu as pltpu


def _round_up(x, m):
    return ((x + m - 1) // m) * m


def _qcbm_kernel(x_ref, sb_ref, out_ref):
    # x_ref:   (rt, L)  lane-dense tile of the flattened (B*F) input slab
    # sb_ref:  (2, L)   row 0 = scale, row 1 = bias (batch-independent, resident)
    # out_ref: (rt, L)  Pauli-Z expectation surrogate, lane-dense store
    scale = sb_ref[0:1, :]
    bias = sb_ref[1:2, :]
    # Hot path: one FMA + one cos per element over the (rt, L) tile.
    out_ref[...] = jnp.cos(x_ref[...] * scale + bias).astype(out_ref.dtype)


def ensemble_qcbm_forward(inputs, seeds, params, q_weights_final,
                          temperature=1.0, out_dtype=jnp.float32):
    """Forward of EnsembleQCBM_0001 with measurement_setting='d'.

    inputs:          (B, N_heads * nqubits) float32  (batch-major, heads contiguous)
    seeds:           (N_heads, 2 * nqubits) float32  (one torch.rand(1, 2*nq) per head)
    params:          (N_heads, nlayers, nqubits, 4) float32
    q_weights_final: (N_heads, nqubits, 3) float32
    returns:         (B, N_heads * nqubits) out_dtype -- concatenated expec_obs per head
    """
    del temperature  # unused in the 'd' measurement path (matches reference)
    B, F = inputs.shape
    H, nlayers, nq, _ = params.shape
    assert F == H * nq, (F, H, nq)

    # ---- Batch-independent parameter fold, hoisted out of the kernel (tiny). ----
    w = params.sum(axis=1)                                       # (H, nq, 4)
    s = seeds.reshape(H, 2, nq)
    scale_f = (w[..., 0] + q_weights_final[..., 0]).reshape(F)   # (F,)
    bias_f = (s[:, 0] * (w[..., 1] + q_weights_final[..., 1])
              + s[:, 1] * w[..., 2]
              + w[..., 3]
              + q_weights_final[..., 2]).reshape(F)              # (F,)

    # ---- Lane-densify the data slab. ----
    # L is a multiple of F (so the per-feature scale/bias pattern repeats exactly
    # within every row of the row-major flattened view) and of 128 (unmasked vst).
    base = (F * 128) // math.gcd(F, 128)          # lcm(F, 128)
    L = base * max(1, 512 // base)                # widen tiny rows toward ~512 lanes
    reps = L // F
    total = B * F
    padded = _round_up(total, L)
    rows = padded // L

    x_flat = inputs.reshape(total).astype(jnp.float32)
    if padded != total:
        x_flat = jnp.pad(x_flat, (0, padded - total))
    x2d = x_flat.reshape(rows, L)

    sb = jnp.stack([jnp.tile(scale_f, reps),
                    jnp.tile(bias_f, reps)], axis=0).astype(jnp.float32)   # (2, L)

    # ---- VMEM-budget / megacore-aware row tiling. ----
    out_itemsize = jnp.dtype(out_dtype).itemsize
    bytes_per_row = L * (4 + out_itemsize)        # input f32 + output, per row
    if rows <= 8:
        rt = rows                                 # block == full dim (valid layout)
    else:
        budget = 12 << 20                         # total double-buffered tile bytes
        rt = max(8, (budget // (2 * bytes_per_row)) // 8 * 8)
        # >= 2 grid steps so the "parallel" axis can shard across v7x's 2 TCs.
        rt = min(rt, _round_up(pl.cdiv(rows, 2), 8))
        rt = min(rt, _round_up(rows, 8))
    grid = (pl.cdiv(rows, rt),)

    out2d = pl.pallas_call(
        _qcbm_kernel,
        out_shape=jax.ShapeDtypeStruct((rows, L), out_dtype),
        grid_spec=pl.GridSpec(
            grid=grid,
            in_specs=[
                pl.BlockSpec((rt, L), lambda i: (i, 0)),   # streamed data tile
                pl.BlockSpec((2, L), lambda i: (0, 0)),    # resident scale/bias
            ],
            out_specs=pl.BlockSpec((rt, L), lambda i: (i, 0)),
        ),
        compiler_params=pltpu.CompilerParams(
            dimension_semantics=("parallel",),
            vmem_limit_bytes=32 * 1024 * 1024),
    )(x2d, sb)

    out_flat = out2d.reshape(padded)
    if padded != total:
        out_flat = out_flat[:total]
    return out_flat.reshape(B, F)


def _reference_forward(inputs, seeds, params, q_weights_final):
    """Pure-JAX reference of the same surrogate circuit (for in-script checking)."""
    B = inputs.shape[0]
    H, _, nq, _ = params.shape
    x = inputs.reshape(B, H, nq)
    s = seeds.reshape(H, 2, nq)
    w = params.sum(axis=1)                                  # (H, nq, 4)
    scale = w[..., 0] + q_weights_final[..., 0]             # (H, nq)
    bias = (s[:, 0] * (w[..., 1] + q_weights_final[..., 1])
            + s[:, 1] * w[..., 2] + w[..., 3] + q_weights_final[..., 2])
    return jnp.cos(x * scale[None] + bias[None]).reshape(B, H * nq)


if __name__ == "__main__":
    N_heads, nqubits, nlayers, B = 4, 8, 3, 2

    key = jax.random.PRNGKey(0)
    k_in, k_seed, k_p, k_w = jax.random.split(key, 4)

    # module input: (B, N_heads * nqubits)
    inputs = jax.random.normal(k_in, (B, N_heads * nqubits), dtype=jnp.float32)

    # forward-time seeds: one torch.rand(1, 2*nqubits) per head (deterministic here)
    seeds = jax.random.uniform(k_seed, (N_heads, 2 * nqubits), dtype=jnp.float32)

    # per-head parameters, deterministic init matching __init__ shapes:
    #   params:          0.1 * randn(nlayers, nqubits, 4)   per head
    #   q_weights_final: 0.1 * randn(nqubits, 3)            per head
    params = 0.1 * jax.random.normal(
        k_p, (N_heads, nlayers, nqubits, 4), dtype=jnp.float32)
    q_weights_final = 0.1 * jax.random.normal(
        k_w, (N_heads, nqubits, 3), dtype=jnp.float32)

    out = ensemble_qcbm_forward(inputs, seeds, params, q_weights_final,
                                temperature=1.0)
    out = jax.block_until_ready(out)

    assert out.shape == (B, N_heads * nqubits), out.shape
    assert out.dtype == jnp.float32
    assert bool(jnp.all(jnp.isfinite(out)))
    assert bool(jnp.all(jnp.abs(out) <= 1.0 + 1e-6))  # expectation values in [-1, 1]

    ref = _reference_forward(inputs, seeds, params, q_weights_final)
    assert bool(jnp.allclose(out, ref, atol=1e-5, rtol=1e-5))

    print("KERNEL_OK")
</pallas_src>

<mosaic_0001>
module attributes {stable_mosaic.version = 11 : i64} {
  func.func @_qcbm_kernel(%arg0: i32, %arg1: memref<1x512xf32, #tpu.memory_space<vmem>>, %arg2: memref<2x512xf32, #tpu.memory_space<vmem>>, %arg3: memref<1x512xf32, #tpu.memory_space<vmem>>) attributes {dimension_semantics = [#tpu.dimension_semantics<parallel>], iteration_bounds = array<i64: 1>, scalar_prefetch = 0 : i64, scratch_operands = 0 : i64, tpu.core_type = #tpu.core_type<tc>, window_params = [{transform_indices = @transform_0, window_bounds = array<i64: 1, 512>}, {pipeline_mode = #tpu.pipeline_mode<synchronous>, transform_indices = @transform_1, window_bounds = array<i64: 2, 512>}, {transform_indices = @transform_2, window_bounds = array<i64: 1, 512>}]} {
    %c0 = arith.constant 0 : index
    %c0_0 = arith.constant 0 : index
    %0 = vector.load %arg2[%c0, %c0_0] : memref<2x512xf32, #tpu.memory_space<vmem>>, vector<1x512xf32>
    %c1 = arith.constant 1 : index
    %c0_1 = arith.constant 0 : index
    %1 = vector.load %arg2[%c1, %c0_1] : memref<2x512xf32, #tpu.memory_space<vmem>>, vector<1x512xf32>
    %c0_2 = arith.constant 0 : index
    %c0_3 = arith.constant 0 : index
    %2 = vector.load %arg1[%c0_2, %c0_3] : memref<1x512xf32, #tpu.memory_space<vmem>>, vector<1x512xf32>
    %3 = arith.mulf %2, %0 : vector<1x512xf32>
    %4 = arith.addf %3, %1 : vector<1x512xf32>
    %5 = math.cos %4 : vector<1x512xf32>
    %c0_4 = arith.constant 0 : index
    %c0_5 = arith.constant 0 : index
    %6 = vector.load %arg3[%c0_4, %c0_5] : memref<1x512xf32, #tpu.memory_space<vmem>>, vector<1x512xf32>
    tpu.vector_store %arg3[%c0_4, %c0_5], %5 {strides = array<i32>} : memref<1x512xf32, #tpu.memory_space<vmem>>, vector<1x512xf32>,
    return
  }
  func.func @transform_0(%arg0: i32) -> (i32, i32) {
    %c0_i32 = arith.constant 0 : i32
    %c0_i32_0 = arith.constant 0 : i32
    return %arg0, %c0_i32 : i32, i32
  }
  func.func @transform_1(%arg0: i32) -> (i32, i32) {
    %c0_i32 = arith.constant 0 : i32
    %c0_i32_0 = arith.constant 0 : i32
    %c0_i32_1 = arith.constant 0 : i32
    return %c0_i32, %c0_i32_0 : i32, i32
  }
  func.func @transform_2(%arg0: i32) -> (i32, i32) {
    %c0_i32 = arith.constant 0 : i32
    %c0_i32_0 = arith.constant 0 : i32
    return %arg0, %c0_i32 : i32, i32
  }
}

</mosaic_0001>

<llo_original>
// kernel: tpu_custom_call.1
$region0: #{tpu_custom_call.1}
  #allocation0 [shape = 'u32[]', space=smem, size = 0x4, offset = 0x4, fixed_abs, tag = 'smem constant byte address 0x4 - core index']
  #allocation1 [shape = 'u32[144,128]{1,0:T(1,128)}', space=vmem, size = 0x12000, scoped, tag = 'internal scratch']
  %s0 = inlined_call_operand.hbm [shape: f32[1,512], index: 0, kind: input, shape index: {}]
  %s1 = inlined_call_operand.hbm [shape: f32[2,512], index: 1, kind: input, shape index: {}]
  %s2 = inlined_call_operand.hbm [shape: f32[1,512], index: 2, kind: output, shape index: {}]
  %s3 = sld [smem:[#allocation0]]
  $region26: #{tpu_custom_call.1} parent=0
    _
  %s5 = ssub.s32 1, %s3
  %s6 = scalar_select 0, %s5, %s3
  $region1: #{tpu_custom_call.1} parent=0
    #allocation2 [shape = 'u8[2048]{0}', space=vmem, size = 0x800, scoped, tag = 'input window, operand 0, single buffered']
    #allocation3 [shape = 's32[1]{0}', space=sflag, size = 0x4, scoped, tag = 'scoped memory for tpu_custom_call.1']
    #allocation4 [shape = 's32[1]{0}', space=sflag, size = 0x4, scoped, tag = 'scoped memory for tpu_custom_call.1']
    #allocation5 [shape = 'u8[4096]{0}', space=vmem, size = 0x1000, scoped, tag = 'input window, operand 1, single buffered']
    #allocation6 [shape = 's32[1]{0}', space=sflag, size = 0x4, scoped, tag = 'scoped memory for tpu_custom_call.1']
    #allocation7 [shape = 'u8[2048]{0}', space=vmem, size = 0x800, scoped, tag = 'output window, operand 0, single buffered']
    %7 = vsyncpa [#allocation3], 0
    %8 = vsyncpa [#allocation6], 0
    %9 = vsyncpa [#allocation4], 0
    // Predicated region
    $region2: #{tpu_custom_call.1} parent=1 // pred_check
      _
    $region3: #{tpu_custom_call.1} parent=1 // pred_check_branch
      %11 = sbr.rel (0) target = $region5
    $region4: #{tpu_custom_call.1} parent=1 // pred_region
      %s13 = ssub.s32 64, 64
      %14 = vsyncadd [#allocation3], %s13
      %s16 = sshll.u32 [#allocation2], 4
      %s17 = int_to_ptr.vmem [resolvable:$true] %s16
      %19 = dma.hbm_to_vmem [thread:$0]  %s0, 64, %s17, [#allocation3]
    $region5: #{tpu_custom_call.1} parent=1 // pred_fallthru
      _
    // Predicated region
    $region6: #{tpu_custom_call.1} parent=1 // pred_check
      _
    $region7: #{tpu_custom_call.1} parent=1 // pred_check_branch
      %21 = sbr.rel (0) target = $region9
    $region8: #{tpu_custom_call.1} parent=1 // pred_region
      %s23 = ssub.s32 128, 128
      %24 = vsyncadd [#allocation6], %s23
      %s26 = sshll.u32 [#allocation5], 4
      %s27 = int_to_ptr.vmem [resolvable:$true] %s26
      %29 = dma.hbm_to_vmem [thread:$0]  %s1, 128, %s27, [#allocation6]
    $region9: #{tpu_custom_call.1} parent=1 // pred_fallthru
      _
    // Predicated region
    $region10: #{tpu_custom_call.1} parent=1 // pred_check
      _
    $region11: #{tpu_custom_call.1} parent=1 // pred_check_branch
      %31 = sbr.rel (0) target = $region13
    $region12: #{tpu_custom_call.1} parent=1 // pred_region
      %32 = dma.done [#allocation3], 64
    $region13: #{tpu_custom_call.1} parent=1 // pred_fallthru
      _
    // Predicated region
    $region14: #{tpu_custom_call.1} parent=1 // pred_check
      _
    $region15: #{tpu_custom_call.1} parent=1 // pred_check_branch
      %34 = sbr.rel (0) target = $region17
    $region16: #{tpu_custom_call.1} parent=1 // pred_region
      %35 = dma.done [#allocation6], 128
    $region17: #{tpu_custom_call.1} parent=1 // pred_fallthru
      _
    %v36 = vld [vmem:[#allocation5] ss:$2 sm:$0xf]
    %s37 = scalar_lea.vmem [#allocation5], 1
    %v38 = vld [vmem:[%s37] ss:$2 sm:$0xf]
    %v39 = vld [vmem:[#allocation2] sm:$0xf]
    %v40 = vmul.f32 %v39, %v36
    %v41 = vadd.f32 %v40, %v38
    %v42 = vand.u32 2147483647, %v41
    %vm43 = vcmp.le.f32.partialorder %v42, 0.7853982
    %vm44 = vcmp.lt.s32.totalorder %v41, 0
    %v45 = vand.u32 %v41, 2139095040
    %v46 = vshrl.u32 %v45, 23
    %v47 = vsub.s32 %v46, 127
    %v48 = vand.u32 2147483647, %v41
    %v49 = vand.u32 %v48, 8388607
    %v50 = vor.u32 %v49, 8388608
    %v51 = vsub.s32 0, %v50
    %v52 = vadd.s32 %v47, 1
    %vm53 = vcmp.gt.s32.totalorder %v52, 0
    %v54 = vsel %vm53, %v52, 0
    %v55 = vshrl.u32 %v54, 5
    %v56 = vand.u32 %v54, 31
    %v57 = vsub.s32 32, %v56
    %v58 = vshrl.u32 683565275, %v57
    %v59 = vshll.u32 683565275, %v56
    %v60 = vshrl.u32 2475754826, %v57
    %v61 = vor.u32 %v59, %v60
    %v62 = vshll.u32 2475754826, %v56
    %v63 = vshrl.u32 2131351028, %v57
    %v64 = vor.u32 %v62, %v63
    %v65 = vshll.u32 2131351028, %v56
    %v66 = vshrl.u32 2102212464, %v57
    %v67 = vor.u32 %v65, %v66
    %v68 = vshll.u32 2102212464, %v56
    %v69 = vshrl.u32 920167782, %v57
    %v70 = vor.u32 %v68, %v69
    %v71 = vshll.u32 920167782, %v56
    %v72 = vshrl.u32 1326507024, %v57
    %v73 = vor.u32 %v71, %v72
    %vm74 = vcmp.lt.s32.totalorder %v55, 1
    %vm75 = vcmp.lt.s32.totalorder %v55, 2
    %vm76 = vcmp.lt.s32.totalorder %v55, 3
    %vm77 = vcmp.lt.s32.totalorder %v55, 4
    %v78 = vsel %vm74, %v58, %v61
    %v79 = vsel %vm77, %v67, 2102212464
    %v80 = vsel %vm76, %v64, %v79
    %v81 = vsel %vm75, %v78, %v80
    %v82 = vsel %vm74, %v61, %v64
    %v83 = vsel %vm77, %v70, 920167782
    %v84 = vsel %vm76, %v67, %v83
    %v85 = vsel %vm75, %v82, %v84
    %v86 = vsel %vm74, %v64, %v67
    %v87 = vsel %vm77, %v73, 1326507024
    %v88 = vsel %vm76, %v70, %v87
    %v89 = vsel %vm75, %v86, %v88
    %v90 = vshll.u32 %v50, 8
    %v91 = vmul.u32.u64.compose %v90, %v89
    %v92 = vextract.low.u32 %v91
    %v93 = vextract.high.u32 %v91
    %v94 = vmul.u32.u64.compose %v90, %v85
    %v95 = vextract.low.u32 %v94
    %v96 = vextract.high.u32 %v94
    %v97 = vmul.u32 %v90, %v81
    %v98 = vadd.s32 %v93, %v95
    %vm99 = vc.u32 %v93, %v95
    %v100 = vadd.s32 %v96, 1
    %v101 = vsel %vm99, %v100, %v96
    %v102 = vadd.s32 %v97, %v101
    %v103 = vadd.s32 %v102, 536870912
    %v104 = vshrl.u32 %v103, 30
    %v105 = vshll.u32 %v104, 30
    %v106 = vsub.s32 %v102, %v105
    %vm107 = vcmp.lt.s32.totalorder %v106, 0
    %v108 = vsub.s32 0, %v106
    %v109 = vsel %vm107, %v108, %v106
    %v110 = vclz %v109
    %v111 = vsub.s32 %v110, 2
    %vm112 = vcmp.gt.s32.totalorder 0, %v111
    %v113 = vsel %vm112, 0, %v111
    %v114 = vsub.s32 32, %v113
    %v115 = vshll.u32 %v106, %v113
    %v116 = vshrl.u32 %v98, %v114
    %v117 = vor.u32 %v115, %v116
    %v118 = vsub.s32 4294967266, %v113
    %v119 = vadd.s32 %v118, 127
    %v120 = vshll.u32 %v119, 23
    %v121 = vor.u32 4788187, %v120
    %v122 = vand.u32 2147483647, %v121
    %v124 = vcvt.s32.f32 %v117
    %v125 = vmul.f32 %v124, %v122
    %v126 = vxor.u32 %v125, 2147483648
    %v127 = vsel %vm44, %v126, %v125
    %v128 = vsub.s32 4, %v104
    %v129 = vsel %vm44, %v128, %v104
    %v130 = vsel %vm43, %v41, %v127
    %v131 = vsel %vm43, 0, %v129
    %v132 = vcosq.f32.pop %v130
    %v133 = vsinq.f32.pop %v130
    %vm134 = vweird.f32 %v41
    %v135 = vand.u32 %v131, 3
    %vm136 = vcmp.lt.s32.totalorder %v135, 2
    %vm137 = vcmp.eq.s32.totalorder %v135, 0
    %v138 = vxor.u32 %v133, 2147483648
    %v139 = vsel %vm137, %v132, %v138
    %vm140 = vcmp.eq.s32.totalorder %v135, 2
    %v141 = vxor.u32 %v132, 2147483648
    %v142 = vsel %vm140, %v141, %v133
    %v143 = vsel %vm136, %v139, %v142
    %v144 = vsel %vm134, nan, %v143
    %v145 = vlaneseq
    %vm146 = vcmp.ge.s32.totalorder %v145, 0
    %vm147 = vcmp.lt.s32.totalorder %v145, 512
    %vm148 = vmand %vm146, %vm147
    %149 = vst.msk [vmem:[#allocation7] sm:$0xf] %vm148, %v144
    // Predicated region
    $region18: #{tpu_custom_call.1} parent=1 // pred_check
      _
    $region19: #{tpu_custom_call.1} parent=1 // pred_check_branch
      %151 = sbr.rel (0) target = $region21
    $region20: #{tpu_custom_call.1} parent=1 // pred_region
      %s153 = ssub.s32 64, 64
      %154 = vsyncadd [#allocation4], %s153
      %s156 = sshll.u32 [#allocation7], 4
      %s157 = int_to_ptr.vmem [resolvable:$true] %s156
      %159 = dma.vmem_to_hbm [thread:$0]  %s157, 64, %s2, [#allocation4]
    $region21: #{tpu_custom_call.1} parent=1 // pred_fallthru
      _
    // Predicated region
    $region22: #{tpu_custom_call.1} parent=1 // pred_check
      _
    $region23: #{tpu_custom_call.1} parent=1 // pred_check_branch
      %161 = sbr.rel (0) target = $region25
    $region24: #{tpu_custom_call.1} parent=1 // pred_region
      %162 = dma.done [#allocation4], 64
    $region25: #{tpu_custom_call.1} parent=1 // pred_fallthru
      _
    %163 = vsyncpa [#allocation3], 1
    %164 = vsyncpa [#allocation6], 1
    %165 = vsyncpa [#allocation4], 1

</llo_original>
